<compile_context>
chip_gen: v5e
topology: v5e:2x2
jax: 0.10.0
libtpu: 0.0.40
codegen_flags: <defaults>
</compile_context>

<pallas_src>
import jax
import jax.numpy as jnp
from jax import lax
from jax.experimental import pallas as pl
from jax.experimental.pallas import tpu as pltpu

n_embd = 64          # C
block_size = 256     # max sequence length (only tril[:T,:T] is ever used)


def _head_kernel(x_ref, w_ref, o_ref):
    """One grid step = TB batch elements.

    x_ref : (TB, T, C)   VMEM
    w_ref : (C, 3H)      VMEM (fused [Wk | Wq | Wv], replicated across grid)
    o_ref : (TB, T, H)   VMEM
    """
    x = x_ref[...]                          # (TB, T, C) f32
    C = x.shape[-1]
    H = o_ref.shape[-1]

    # Fused k/q/v projection: one MXU matmul with N = 3H, f32 accumulation.
    kqv = lax.dot_general(
        x, w_ref[...],
        dimension_numbers=(((2,), (0,)), ((), ())),
        preferred_element_type=jnp.float32)                     # (TB, T, 3H)
    k = kqv[:, :, 0:H]
    q = kqv[:, :, H:2 * H]
    v = kqv[:, :, 2 * H:3 * H]

    # Scale q (TB*T*H mults) instead of the (TB,T,T) score matrix.
    q = q * (C ** -0.5)

    # Attention scores: contract the head dim directly (no k.T materialized).
    s = lax.dot_general(
        q, k,
        dimension_numbers=(((2,), (2,)), ((0,), (0,))),
        preferred_element_type=jnp.float32)                     # (TB, T, T)

    # Causal mask (tril).  TPU iota must be >= 2D.
    T = s.shape[-1]
    row = lax.broadcasted_iota(jnp.int32, (T, T), 0)
    col = lax.broadcasted_iota(jnp.int32, (T, T), 1)
    mask = col <= row                                           # (T, T) bool
    s = jnp.where(mask[None], s, -jnp.inf)

    # Softmax over the last axis (f32 throughout; exp(-inf - m) == 0).
    m = jnp.max(s, axis=-1, keepdims=True)
    p = jnp.exp(s - m)
    denom = jnp.sum(p, axis=-1, keepdims=True)
    p = p * pl.reciprocal(denom, approx=True)                   # EUP slot

    # Weighted sum of values.
    out = lax.dot_general(
        p.astype(v.dtype), v,
        dimension_numbers=(((2,), (1,)), ((0,), (0,))),
        preferred_element_type=jnp.float32)                     # (TB, T, H)
    o_ref[...] = out.astype(o_ref.dtype)


def _pick_tb(B, max_tb=8):
    """Largest divisor of B <= max_tb, reduced if needed so the (parallel)
    batch grid has >=2 steps (keeps both v7x TensorCores busy)."""
    tb = max(1, min(max_tb, B))
    while B % tb:
        tb -= 1
    if B >= 2 and B // tb < 2:
        tb = max(1, tb // 2)
        while B % tb:
            tb -= 1
    return tb


def head_forward(x, w_key, w_query, w_value, *, max_tb=8):
    """x: (B, T, C) f32; w_*: (C, head_size) f32 -> (B, T, head_size)."""
    B, T, C = x.shape
    H = w_key.shape[1]

    # Fuse the three projection weights into one (C, 3H) operand.
    w_kqv = jnp.concatenate([w_key, w_query, w_value], axis=1)

    tb = _pick_tb(B, max_tb)

    return pl.pallas_call(
        _head_kernel,
        out_shape=jax.ShapeDtypeStruct((B, T, H), x.dtype),
        grid_spec=pltpu.PrefetchScalarGridSpec(
            num_scalar_prefetch=0,
            grid=(B // tb,),
            in_specs=[
                pl.BlockSpec((tb, T, C), lambda b: (b, 0, 0)),
                pl.BlockSpec((C, 3 * H), lambda b: (0, 0)),
            ],
            out_specs=pl.BlockSpec((tb, T, H), lambda b: (b, 0, 0)),
        ),
        compiler_params=pltpu.CompilerParams(
            dimension_semantics=("parallel",),
        ),
    )(x, w_kqv)


def reference_forward(x, w_key, w_query, w_value):
    """Pure-JAX reference mirroring the PyTorch forward (eval mode)."""
    B, T, C = x.shape
    k = x @ w_key
    q = x @ w_query
    v = x @ w_value
    wei = (q @ jnp.swapaxes(k, -2, -1)) * (C ** -0.5)
    tril = jnp.tril(jnp.ones((T, T), dtype=bool))
    wei = jnp.where(tril, wei, -jnp.inf)
    wei = jax.nn.softmax(wei, axis=-1)
    return wei @ v


if __name__ == "__main__":
    key = jax.random.PRNGKey(0)
    B, T, C = 2, 8, n_embd
    head_size = 16

    kx, kk, kq, kv = jax.random.split(key, 4)
    x = jax.random.normal(kx, (B, T, C), dtype=jnp.float32)
    # Deterministic init (shapes from nn.Linear(n_embd, head_size, bias=False)).
    w_key = jax.random.normal(kk, (C, head_size), dtype=jnp.float32) * 0.02
    w_query = jax.random.normal(kq, (C, head_size), dtype=jnp.float32) * 0.02
    w_value = jax.random.normal(kv, (C, head_size), dtype=jnp.float32) * 0.02

    out = head_forward(x, w_key, w_query, w_value)
    out = jax.block_until_ready(out)

    ref = reference_forward(x, w_key, w_query, w_value)
    assert out.shape == (B, T, head_size)
    # Tolerance slightly loosened vs strict f32 because the softmax denominator
    # uses the EUP approximate reciprocal (relative error ~1e-4).
    assert jnp.allclose(out, ref, atol=2e-3, rtol=2e-3), "mismatch vs reference"

    print("KERNEL_OK")
</pallas_src>

<mosaic_0001>
module attributes {stable_mosaic.version = 11 : i64} {
  func.func @_head_kernel(%arg0: i32, %arg1: memref<1x8x64xf32, #tpu.memory_space<vmem>>, %arg2: memref<64x48xf32, #tpu.memory_space<vmem>>, %arg3: memref<1x8x16xf32, #tpu.memory_space<vmem>>) attributes {dimension_semantics = [#tpu.dimension_semantics<parallel>], iteration_bounds = array<i64: 2>, scalar_prefetch = 0 : i64, scratch_operands = 0 : i64, tpu.core_type = #tpu.core_type<tc>, window_params = [{transform_indices = @transform_0, window_bounds = array<i64: 1, 8, 64>}, {pipeline_mode = #tpu.pipeline_mode<synchronous>, transform_indices = @transform_1, window_bounds = array<i64: 64, 48>}, {transform_indices = @transform_2, window_bounds = array<i64: 1, 8, 16>}]} {
    %c0 = arith.constant 0 : index
    %c0_0 = arith.constant 0 : index
    %c0_1 = arith.constant 0 : index
    %0 = vector.load %arg1[%c0, %c0_0, %c0_1] : memref<1x8x64xf32, #tpu.memory_space<vmem>>, vector<1x8x64xf32>
    %c0_2 = arith.constant 0 : index
    %c0_3 = arith.constant 0 : index
    %1 = vector.load %arg2[%c0_2, %c0_3] : memref<64x48xf32, #tpu.memory_space<vmem>>, vector<64x48xf32>
    %cst = arith.constant dense<0.000000e+00> : vector<1x8x48xf32>
    %2 = tpu.matmul %0, %1, %cst {dimension_numbers = #tpu.dot_dimension_numbers<[2], [0], [0, 1], [1], [0, 0, 0, 1, 1, 1], [], []>} : vector<1x8x64xf32>, vector<64x48xf32>, vector<1x8x48xf32> -> vector<1x8x48xf32>
    %3 = vector.extract_strided_slice %2 {offsets = [0, 0, 0], sizes = [1, 8, 16], strides = [1, 1, 1]} : vector<1x8x48xf32> to vector<1x8x16xf32>
    %4 = vector.extract_strided_slice %2 {offsets = [0, 0, 16], sizes = [1, 8, 16], strides = [1, 1, 1]} : vector<1x8x48xf32> to vector<1x8x16xf32>
    %5 = vector.extract_strided_slice %2 {offsets = [0, 0, 32], sizes = [1, 8, 16], strides = [1, 1, 1]} : vector<1x8x48xf32> to vector<1x8x16xf32>
    %cst_4 = arith.constant 1.250000e-01 : f32
    %6 = vector.broadcast %cst_4 : f32 to vector<1x8x16xf32>
    %7 = arith.mulf %4, %6 : vector<1x8x16xf32>
    %cst_5 = arith.constant dense<0.000000e+00> : vector<1x8x8xf32>
    %8 = tpu.matmul %7, %3, %cst_5 {dimension_numbers = #tpu.dot_dimension_numbers<[2], [2], [1], [1], [0, 0, 0, 1, 1, 1], [0], [0]>} : vector<1x8x16xf32>, vector<1x8x16xf32>, vector<1x8x8xf32> -> vector<1x8x8xf32>
    %9 = tpu.iota {dimensions = array<i32: 0>} : vector<8x8xi32>
    %10 = tpu.iota {dimensions = array<i32: 1>} : vector<8x8xi32>
    %11 = arith.cmpi sle, %10, %9 : vector<8x8xi32>
    %12 = vector.shape_cast %11 : vector<8x8xi1> to vector<1x8x8xi1>
    %cst_6 = arith.constant 0xFF800000 : f32
    %13 = vector.broadcast %cst_6 : f32 to vector<1x8x8xf32>
    %14 = arith.select %12, %8, %13 : vector<1x8x8xi1>, vector<1x8x8xf32>
    %cst_7 = arith.constant dense<0xFF800000> : vector<1x8xf32>
    %15 = vector.multi_reduction <maximumf>, %14, %cst_7 [2] : vector<1x8x8xf32> to vector<1x8xf32>
    %16 = vector.shape_cast %15 : vector<1x8xf32> to vector<1x8x1xf32>
    %17 = vector.broadcast %16 : vector<1x8x1xf32> to vector<1x8x8xf32>
    %18 = arith.subf %14, %17 : vector<1x8x8xf32>
    %19 = math.exp %18 : vector<1x8x8xf32>
    %cst_8 = arith.constant dense<0.000000e+00> : vector<1x8xf32>
    %20 = vector.multi_reduction <add>, %19, %cst_8 [2] : vector<1x8x8xf32> to vector<1x8xf32>
    %21 = vector.shape_cast %20 : vector<1x8xf32> to vector<1x8x1xf32>
    %22 = tpu.reciprocal %21 {approx = true} : vector<1x8x1xf32> -> vector<1x8x1xf32>
    %23 = vector.broadcast %22 : vector<1x8x1xf32> to vector<1x8x8xf32>
    %24 = arith.mulf %19, %23 : vector<1x8x8xf32>
    %cst_9 = arith.constant dense<0.000000e+00> : vector<1x8x16xf32>
    %25 = tpu.matmul %24, %5, %cst_9 {dimension_numbers = #tpu.dot_dimension_numbers<[2], [1], [1], [2], [0, 0, 0, 1, 1, 2], [0], [0]>} : vector<1x8x8xf32>, vector<1x8x16xf32>, vector<1x8x16xf32> -> vector<1x8x16xf32>
    %c0_10 = arith.constant 0 : index
    %c0_11 = arith.constant 0 : index
    %c0_12 = arith.constant 0 : index
    %26 = vector.load %arg3[%c0_10, %c0_11, %c0_12] : memref<1x8x16xf32, #tpu.memory_space<vmem>>, vector<1x8x16xf32>
    tpu.vector_store %arg3[%c0_10, %c0_11, %c0_12], %25 {strides = array<i32>} : memref<1x8x16xf32, #tpu.memory_space<vmem>>, vector<1x8x16xf32>,
    return
  }
  func.func @transform_0(%arg0: i32) -> (i32, i32, i32) {
    %c0_i32 = arith.constant 0 : i32
    %c0_i32_0 = arith.constant 0 : i32
    %c0_i32_1 = arith.constant 0 : i32
    return %arg0, %c0_i32, %c0_i32_0 : i32, i32, i32
  }
  func.func @transform_1(%arg0: i32) -> (i32, i32) {
    %c0_i32 = arith.constant 0 : i32
    %c0_i32_0 = arith.constant 0 : i32
    %c0_i32_1 = arith.constant 0 : i32
    return %c0_i32, %c0_i32_0 : i32, i32
  }
  func.func @transform_2(%arg0: i32) -> (i32, i32, i32) {
    %c0_i32 = arith.constant 0 : i32
    %c0_i32_0 = arith.constant 0 : i32
    %c0_i32_1 = arith.constant 0 : i32
    return %arg0, %c0_i32, %c0_i32_0 : i32, i32, i32
  }
}

</mosaic_0001>

<llo_original>
// kernel: tpu_custom_call.1
$region0: #{tpu_custom_call.1}
  #allocation0 [shape = 'u32[]', space=smem, size = 0x4, offset = 0x4, fixed_abs, tag = 'smem constant byte address 0x4 - core index']
  #allocation1 [shape = 'u32[72,128]{1,0:T(1,128)}', space=vmem, size = 0x9000, scoped, tag = 'internal scratch']
  %s0 = inlined_call_operand.vmem [shape: f32[2,8,64], index: 0, kind: input, shape index: {}]
  %s1 = inlined_call_operand.vmem [shape: f32[64,48], index: 1, kind: input, shape index: {}]
  %s2 = inlined_call_operand.hbm [shape: f32[2,8,16], index: 2, kind: output, shape index: {}]
  %s3 = sld [smem:[#allocation0]]
  $region41: #{tpu_custom_call.1} parent=0
    _
  %s5 = ssub.s32 1, %s3
  %s6 = scalar_select 0, %s5, %s3
  $region1: #{tpu_custom_call.1} parent=0
    #allocation2 [shape = 'u8[8192]{0}', space=vmem, size = 0x2000, scoped, tag = 'output window, operand 0']
    #allocation3 [shape = 's32[2]{0}', space=sflag, size = 0x8, scoped, tag = 'scoped memory for tpu_custom_call.1']
    %7 = vsyncpa [#allocation3], 0
    %s8 = scalar_lea.sflag [#allocation3], 1
    %9 = vsyncpa %s8, 0
    loop: start=0, step=1, limit=4
    $region2: #{tpu_custom_call.1} parent=1 // loop_pre_header
      _
    $region3: #{tpu_custom_call.1} parent=1 // loop_header
      %s11 = sphi 0, %s15
      %p12 = scmp.ge.s32.totalorder %s11, 4
      %s21 = sphi 0, %s23
      %s24 = sphi 0, %s21
      %s25 = sphi 0, %s24
      %s41 = sphi 0, %s25
      %s45 = sphi 0, %s45
      %s47 = sphi 0, %s45
      %s48 = sphi 0, %s47
      %s62 = sphi 0, %s48
      %s68 = sphi 0, %s70
      %s71 = sphi 0, %s68
      %s72 = sphi 0, %s71
      %s88 = sphi 0, %s72
    $region4: #{tpu_custom_call.1} parent=1 // loop_header_branch
      %14 = sbr.rel (%p12) target = $region8
    $region5: #{tpu_custom_call.1} parent=1 // loop_body
      %s16 = ssub.s32 %s11, 1
      %s17 = ssub.s32 %s11, 2
      %s18 = sadd.s32 %s11, 1
      %s19 = ssub.s32 %s11, %s18
      %p20 = scmp.eq.s32.totalorder %s19, 0
      %s22 = sadd.s32 %s21, 1
      %s23 = scalar_select %p20, %s21, %s22
      %p26 = pneg %p20
      %p27 = scmp.eq.s32.totalorder %s11, 1
      %p28 = por %p26, %p27
      %p29 = scmp.ne.s32.totalorder %s21, %s24
      %p30 = scmp.eq.s32.totalorder %s11, 0
      %p31 = por %p29, %p30
      %p32 = scmp.ne.s32.totalorder %s21, %s24
      %p33 = scmp.eq.s32.totalorder %s16, 1
      %p34 = por %p32, %p33
      %p35 = scmp.ne.s32.totalorder %s24, %s25
      %p36 = scmp.eq.s32.totalorder %s16, 0
      %p37 = por %p35, %p36
      %p38 = scmp.ne.s32.totalorder %s24, %s25
      %p39 = scmp.eq.s32.totalorder %s17, 1
      %p40 = por %p38, %p39
      %p42 = scmp.ne.s32.totalorder %s25, %s41
      %p43 = scmp.eq.s32.totalorder %s17, 0
      %p44 = por %p42, %p43
      %s46 = sadd.s32 %s45, 1
      %p49 = scmp.eq.s32.totalorder %s11, 1
      %p50 = scmp.ne.s32.totalorder %s45, %s47
      %p51 = scmp.eq.s32.totalorder %s11, 0
      %p52 = por %p50, %p51
      %p53 = scmp.ne.s32.totalorder %s45, %s47
      %p54 = scmp.eq.s32.totalorder %s16, 1
      %p55 = por %p53, %p54
      %p56 = scmp.ne.s32.totalorder %s47, %s48
      %p57 = scmp.eq.s32.totalorder %s16, 0
      %p58 = por %p56, %p57
      %p59 = scmp.ne.s32.totalorder %s47, %s48
      %p60 = scmp.eq.s32.totalorder %s17, 1
      %p61 = por %p59, %p60
      %p63 = scmp.ne.s32.totalorder %s48, %s62
      %p64 = scmp.eq.s32.totalorder %s17, 0
      %p65 = por %p63, %p64
      %s66 = ssub.s32 %s11, %s18
      %p67 = scmp.eq.s32.totalorder %s66, 0
      %s69 = sadd.s32 %s68, 1
      %s70 = scalar_select %p67, %s68, %s69
      %p73 = pneg %p67
      %p74 = scmp.eq.s32.totalorder %s11, 1
      %p75 = por %p73, %p74
      %p76 = scmp.ne.s32.totalorder %s68, %s71
      %p77 = scmp.eq.s32.totalorder %s11, 0
      %p78 = por %p76, %p77
      %p79 = scmp.ne.s32.totalorder %s68, %s71
      %p80 = scmp.eq.s32.totalorder %s16, 1
      %p81 = por %p79, %p80
      %p82 = scmp.ne.s32.totalorder %s71, %s72
      %p83 = scmp.eq.s32.totalorder %s16, 0
      %p84 = por %p82, %p83
      %p85 = scmp.ne.s32.totalorder %s71, %s72
      %p86 = scmp.eq.s32.totalorder %s17, 1
      %p87 = por %p85, %p86
      %p89 = scmp.ne.s32.totalorder %s72, %s88
      %p90 = scmp.eq.s32.totalorder %s17, 0
      %p91 = por %p89, %p90
      %p92 = scmp.le.s32.totalorder 1, %s11
      %p93 = scmp.lt.s32.totalorder %s11, 3
      %p94 = pnand %p92, %p93
      %p95 = pneg %p94
      // Predicated region
      $region9: #{tpu_custom_call.1} parent=5 // pred_check
        _
      $region10: #{tpu_custom_call.1} parent=5 // pred_check_branch
        %97 = sbr.rel (%p94) target = $region12
      $region11: #{tpu_custom_call.1} parent=5 // pred_region
        %s98 = ssub.s32 %s11, 1
        // Predicated region
        $region13: #{tpu_custom_call.1} parent=11 // pred_check
          %p99 = pneg %p58
        $region14: #{tpu_custom_call.1} parent=11 // pred_check_branch
          %101 = sbr.rel (%p99) target = $region16
        $region15: #{tpu_custom_call.1} parent=11 // pred_region
          _
        $region16: #{tpu_custom_call.1} parent=11 // pred_fallthru
          _
      $region12: #{tpu_custom_call.1} parent=5 // pred_fallthru
        _
      %p102 = scmp.lt.s32.totalorder %s11, 2
      // Predicated region
      $region17: #{tpu_custom_call.1} parent=5 // pred_check
        %p103 = pneg %p102
      $region18: #{tpu_custom_call.1} parent=5 // pred_check_branch
        %105 = sbr.rel (%p103) target = $region20
      $region19: #{tpu_custom_call.1} parent=5 // pred_region
        // Predicated region
        $region21: #{tpu_custom_call.1} parent=19 // pred_check
          %p106 = pneg %p31
        $region22: #{tpu_custom_call.1} parent=19 // pred_check_branch
          %108 = sbr.rel (%p106) target = $region24
        $region23: #{tpu_custom_call.1} parent=19 // pred_region
          %p109 = scmp.lt.s32.totalorder %s11, 1
          %s110 = scalar_select %p109, %s11, 1
          %s111 = smul.addr %s110, 8
          %s112 = scalar_lea.vmem %s0, %s111
        $region24: #{tpu_custom_call.1} parent=19 // pred_fallthru
          _
      $region20: #{tpu_custom_call.1} parent=5 // pred_fallthru
        _
      %p113 = scmp.le.s32.totalorder 1, %s11
      %p114 = scmp.lt.s32.totalorder %s11, 3
      %p115 = pnand %p113, %p114
      %p116 = pneg %p115
      // Predicated region
      $region25: #{tpu_custom_call.1} parent=5 // pred_check
        _
      $region26: #{tpu_custom_call.1} parent=5 // pred_check_branch
        %118 = sbr.rel (%p115) target = $region28
      $region27: #{tpu_custom_call.1} parent=5 // pred_region
        %s119 = ssub.s32 %s11, 1
        %p120 = scmp.lt.s32.totalorder %s16, 1
        %s121 = scalar_select %p120, %s16, 1
        %s122 = smul.addr %s121, 8
        %s123 = scalar_lea.vmem %s0, %s122
        %p124 = pneg %p37
        %p125 = pneg %p34
        %p126 = pneg %p58
        %p127 = pneg %p55
        %p128 = pneg %p84
        %p129 = pneg %p81
        %s130 = sand.u32 %s71, 1
        %s131 = scalar_lea.sflag [#allocation3], %s130
        %s132 = sand.u32 %s71, 1
        %s133 = smul.addr %s132, 8
        %s134 = scalar_lea.vmem [#allocation2], %s133
        %p135 = scmp.lt.s32.totalorder %s16, 1
        %s136 = scalar_select %p135, %s16, 1
        %s137 = smul.addr %s136, 8
        %s138 = scalar_lea.vmem %s0, %s137
        %v139 = vld [vmem:[%s138] sm:$0xff]
        %v140 = vld [vmem:[%s1] sm:$0xff]
        %v141 = vld [vmem:[%s1 + $0x8] sm:$0xff]
        %v142 = vld [vmem:[%s1 + $0x10] sm:$0xff]
        %v143 = vld [vmem:[%s1 + $0x18] sm:$0xff]
        %v144 = vld [vmem:[%s1 + $0x20] sm:$0xff]
        %v145 = vld [vmem:[%s1 + $0x28] sm:$0xff]
        %v146 = vld [vmem:[%s1 + $0x30] sm:$0xff]
        %v147 = vld [vmem:[%s1 + $0x38] sm:$0xff]
        %vm148 = vcmask 523264
        %v150 = vsel %vm148, %v139, 0
        %152 = vmatpush.msra.mxu0 0.0
        %153 = vmatpush.msra.mxu0 0.0
        %154 = vmatpush.msra.mxu0 0.0
        %155 = vmatpush.msra.mxu0 0.0
        %156 = vmatpush.msra.mxu0 0.0
        %157 = vmatpush.msra.mxu0 0.0
        %158 = vmatpush.msra.mxu0 0.0
        %159 = vmatpush.msra.mxu0 0.0
        %160 = vmatpush.msra.mxu0 %v147
        %161 = vmatpush.msra.mxu0 %v146
        %162 = vmatpush.msra.mxu0 %v145
        %163 = vmatpush.msra.mxu0 %v144
        %164 = vmatpush.msra.mxu0 %v143
        %165 = vmatpush.msra.mxu0 %v142
        %166 = vmatpush.msra.mxu0 %v141
        %167 = vmatpush.msra.mxu0 %v140
        %168 = vmatmul.f32.gmra.mxu0 %v150
        %v169 = vpop.f32.mrf.mxu0
        %v170 = vadd.f32 0.0, %v169
        %171 = vdwg.mxu0
        %v172 = vmul.f32 %v170, 0.125
        %174 = vrot.lane.b32.xlu0 %v172, 112
        %v175 = vpop.permute.xlu0 %174
        %vm176 = vcmask 130048
        %v177 = vsel %vm176, %v175, 0
        %v180 = vsel %vm176, %v170, 0
        %182 = vmatpush.xpose.msra.mxu0 0.0
        %183 = vmatpush.xpose.msra.mxu0 0.0
        %184 = vmatpush.xpose.msra.mxu0 0.0
        %185 = vmatpush.xpose.msra.mxu0 0.0
        %186 = vmatpush.xpose.msra.mxu0 0.0
        %187 = vmatpush.xpose.msra.mxu0 0.0
        %188 = vmatpush.xpose.msra.mxu0 0.0
        %189 = vmatpush.xpose.msra.mxu0 0.0
        %190 = vmatpush.xpose.msra.mxu0 0.0
        %191 = vmatpush.xpose.msra.mxu0 0.0
        %192 = vmatpush.xpose.msra.mxu0 0.0
        %193 = vmatpush.xpose.msra.mxu0 0.0
        %194 = vmatpush.xpose.msra.mxu0 0.0
        %195 = vmatpush.xpose.msra.mxu0 0.0
        %196 = vmatpush.xpose.msra.mxu0 0.0
        %197 = vmatpush.xpose.msra.mxu0 %v180
        %198 = vmatmul.f32.gmra.mxu0 %v177
        %v199 = vpop.f32.mrf.mxu0
        %v200 = vadd.f32 0.0, %v199
        %201 = vdwg.mxu0
        %v202 = vlaneseq
        %v203 = vshrl.u32 %v202, 7
        %v204 = vlaneseq
        %v205 = vand.u32 %v204, 127
        %vm206 = vcmp.le.s32.totalorder %v205, %v203
        %v207 = vsel %vm206, %v200, -inf
        %vm208 = vcmask 64512
        %v209 = vsel %vm208, %v207, -inf
        %210 = vmax.xlane.f32.xlu0 %v209
        %v211 = vpop.xlane.xlu0 %210
        %v212 = vsub.f32 %v207, %v211
        %v213 = vmul.f32 %v212, 1.442695
        %v214 = vpow.pop %v213
        %v215 = vsel %vm208, %v214, 0.0
        %216 = vadd.xlane.f32.xlu0 %v215
        %v217 = vpop.xlane.xlu0 %216
        %v218 = vrcp.pop %v217
        %v219 = vmul.f32 %v214, %v218
        %220 = vrot.lane.b32.xlu0 %v170, 96
        %v221 = vpop.permute.xlu0 %220
        %v224 = vsel %vm208, %v219, 0
        %226 = vmatpush.msra.mxu0 0.0
        %227 = vmatpush.msra.mxu0 0.0
        %228 = vmatpush.msra.mxu0 0.0
        %229 = vmatpush.msra.mxu0 0.0
        %230 = vmatpush.msra.mxu0 0.0
        %231 = vmatpush.msra.mxu0 0.0
        %232 = vmatpush.msra.mxu0 0.0
        %233 = vmatpush.msra.mxu0 0.0
        %234 = vmatpush.msra.mxu0 0.0
        %235 = vmatpush.msra.mxu0 0.0
        %236 = vmatpush.msra.mxu0 0.0
        %237 = vmatpush.msra.mxu0 0.0
        %238 = vmatpush.msra.mxu0 0.0
        %239 = vmatpush.msra.mxu0 0.0
        %240 = vmatpush.msra.mxu0 0.0
        %241 = vmatpush.msra.mxu0 %v221
        %242 = vmatmul.f32.gmra.mxu0 %v224
        %v243 = vpop.f32.mrf.mxu0
        %v244 = vadd.f32 0.0, %v243
        %245 = vdwg.mxu0
        %246 = vst.msk [vmem:[%s134] sm:$0xff] %vm176, %v244
        %s247 = sand.u32 %s71, 1
        %s248 = scalar_lea.sflag [#allocation3], %s247
        %s249 = sand.u32 %s71, 1
        %s250 = smul.addr %s249, 8
        %s251 = scalar_lea.vmem [#allocation2], %s250
        // Predicated region
        $region29: #{tpu_custom_call.1} parent=27 // pred_check
          %p252 = pneg %p81
        $region30: #{tpu_custom_call.1} parent=27 // pred_check_branch
          %254 = sbr.rel (%p252) target = $region32
        $region31: #{tpu_custom_call.1} parent=27 // pred_region
          %256 = vsyncadd %s248, 0
          %s257 = smul.addr %s16, 8
          %s258 = scalar_lea.hbm %s2, %s257
          %s260 = sshll.u32 %s251, 4
          %s261 = int_to_ptr.vmem [resolvable:$true] %s260
          %s262 = sshll.u32 %s258, 4
          %s263 = int_to_ptr.hbm [resolvable:$true] %s262
          %265 = dma.vmem_to_hbm [thread:$0]  %s261, 128, %s263, %s248
        $region32: #{tpu_custom_call.1} parent=27 // pred_fallthru
          _
      $region28: #{tpu_custom_call.1} parent=5 // pred_fallthru
        _
      %p266 = scmp.le.s32.totalorder 2, %s11
      // Predicated region
      $region33: #{tpu_custom_call.1} parent=5 // pred_check
        %p267 = pneg %p266
      $region34: #{tpu_custom_call.1} parent=5 // pred_check_branch
        %269 = sbr.rel (%p267) target = $region36
      $region35: #{tpu_custom_call.1} parent=5 // pred_region
        %s270 = ssub.s32 %s11, 2
        // Predicated region
        $region37: #{tpu_custom_call.1} parent=35 // pred_check
          %p271 = pneg %p87
        $region38: #{tpu_custom_call.1} parent=35 // pred_check_branch
          %273 = sbr.rel (%p271) target = $region40
        $region39: #{tpu_custom_call.1} parent=35 // pred_region
          %s274 = sand.u32 %s72, 1
          %s275 = scalar_lea.sflag [#allocation3], %s274
          %s276 = sand.u32 %s72, 1
          %s277 = smul.addr %s276, 8
          %s278 = scalar_lea.vmem [#allocation2], %s277
          %280 = dma.done %s275, 128
        $region40: #{tpu_custom_call.1} parent=35 // pred_fallthru
          _
      $region36: #{tpu_custom_call.1} parent=5 // pred_fallthru
        _
    $region6: #{tpu_custom_call.1} parent=1 // loop_footer
      %s15 = sadd.s32 1, %s11
    $region7: #{tpu_custom_call.1} parent=1 // loop_footer_branch
      %10 = sbr.rel target = $region3
    $region8: #{tpu_custom_call.1} parent=1 // loop_exit
      _
    %281 = vsyncpa [#allocation3], 1
    %s282 = scalar_lea.sflag [#allocation3], 1
    %283 = vsyncpa %s282, 1

</llo_original>
